<compile_context>
chip_gen: v5e
topology: v5e:2x2
jax: 0.10.0
libtpu: 0.0.40
codegen_flags: <defaults>
</compile_context>

<pallas_src>
import jax
import jax.numpy as jnp
from jax.experimental import pallas as pl
from jax.experimental.pallas import tpu as pltpu


HIDDEN = 64
N_PAD = 128                      # final Linear(64 -> 1) padded to 128 cols in VMEM only
_VMEM_BUDGET = 24 * 1024 * 1024  # keep per-call VMEM well under the 32 MiB scoped default


def _round_up(n, m):
    return ((n + m - 1) // m) * m


def critic_kernel(x_ref, w1_ref, b1_ref, w2_ref, b2_ref, w3_ref, b3_ref, o_ref):
    # Layer 1: Linear(state_dim -> 64) + Tanh (fp32; tanh goes to the EUP slot).
    h1 = jnp.tanh(
        jnp.dot(x_ref[...], w1_ref[...], preferred_element_type=jnp.float32)
        + b1_ref[...]
    )
    # Layer 2: Linear(64 -> 64) + Tanh.
    h2 = jnp.tanh(
        jnp.dot(h1, w2_ref[...], preferred_element_type=jnp.float32)
        + b2_ref[...]
    )
    # Layer 3: Linear(64 -> 128-padded) kept in registers; only the real value
    # column (col 0) is written back, so HBM writeback is 4 B/row.
    v = (
        jnp.dot(h2, w3_ref[...], preferred_element_type=jnp.float32)
        + b3_ref[...]
    )
    o_ref[...] = v[:, :1]


def prepare_critic_params(params):
    """One-time parameter prep (hoisted out of the per-call path).

    Pads the (64, 1) value head to a lane-dense (64, 128) VMEM operand
    (real weights in column 0, zeros elsewhere) and ensures fp32 dtypes.
    """
    w1, b1, w2, b2, w3, b3 = params
    H = w1.shape[1]
    w3p = jnp.zeros((H, N_PAD), jnp.float32).at[:, :1].set(w3.astype(jnp.float32))
    b3p = jnp.zeros((1, N_PAD), jnp.float32).at[:, :1].set(b3.astype(jnp.float32))
    return (
        w1.astype(jnp.float32),
        b1.astype(jnp.float32),
        w2.astype(jnp.float32),
        b2.astype(jnp.float32),
        w3p,
        b3p,
    )


def _vmem_bytes(tm, state_dim):
    """Rough per-call VMEM estimate for a given batch tile size."""
    h = HIDDEN
    x_io = 2 * tm * state_dim * 4                                  # x tile, double-buffered
    o_io = 2 * tm * 1 * 4                                          # output tile, double-buffered
    w_res = 2 * (state_dim * h + h * h + h * N_PAD + 2 * h + N_PAD) * 4  # resident weights/biases
    tmps = tm * (2 * h + N_PAD) * 4                                # h1, h2, padded result
    return x_io + o_io + w_res + tmps


def _choose_tm(B, block_m):
    """Batch tile size: minimal padding waste, >= 2 tiles for megacore when B is large."""
    b8 = _round_up(max(B, 1), 8)
    if b8 <= 512:
        return b8                                   # tiny batch: one tile
    n_tiles = max(2, pl.cdiv(b8, block_m))          # >= 2 tiles so both v7x TCs get work
    return min(_round_up(pl.cdiv(b8, n_tiles), 8), block_m)


def critic_forward(x, prepared_params, *, block_m=4096):
    """x: [B, state_dim] float32 -> value: [B, 1] float32."""
    w1, b1, w2, b2, w3p, b3p = prepared_params
    B, state_dim = x.shape
    H = w1.shape[1]

    # Pick the batch tile, then clamp it to the VMEM budget (matters for large
    # state_dim / v7x's smaller VMEM).
    tm = _choose_tm(B, block_m)
    while _vmem_bytes(tm, state_dim) > _VMEM_BUDGET and tm > 512:
        tm = _round_up(max(tm // 2, 8), 8)

    b_pad = _round_up(B, tm)
    x = x.astype(jnp.float32)
    if b_pad != B:
        x = jnp.pad(x, ((0, b_pad - B), (0, 0)))
    grid = (b_pad // tm,)

    const = lambda i: (0, 0)  # weights/biases: same block every grid step (stay resident)

    flops = 2 * b_pad * (state_dim * H + H * H + H * N_PAD)
    bytes_accessed = (
        b_pad * state_dim * 4                               # x (fp32)
        + (state_dim * H + H * H + H * N_PAD) * 4           # weights (fp32)
        + (2 * H + N_PAD) * 4                               # biases (fp32)
        + b_pad * 1 * 4                                     # output (fp32, 1 col)
    )

    out = pl.pallas_call(
        critic_kernel,
        out_shape=jax.ShapeDtypeStruct((b_pad, 1), jnp.float32),
        grid_spec=pltpu.PrefetchScalarGridSpec(
            num_scalar_prefetch=0,
            grid=grid,
            in_specs=[
                pl.BlockSpec((tm, state_dim), lambda i: (i, 0)),  # x tile
                pl.BlockSpec((state_dim, H), const),              # w1
                pl.BlockSpec((1, H), const),                      # b1
                pl.BlockSpec((H, H), const),                      # w2
                pl.BlockSpec((1, H), const),                      # b2
                pl.BlockSpec((H, N_PAD), const),                  # w3 (padded)
                pl.BlockSpec((1, N_PAD), const),                  # b3 (padded)
            ],
            out_specs=pl.BlockSpec((tm, 1), lambda i: (i, 0)),
        ),
        compiler_params=pltpu.CompilerParams(
            dimension_semantics=("parallel",),   # megacore sharding on v7x
            vmem_limit_bytes=32 * 1024 * 1024,
        ),
        cost_estimate=pl.CostEstimate(
            flops=flops,
            transcendentals=2 * b_pad * H,
            bytes_accessed=bytes_accessed,
        ),
    )(x, w1, b1, w2, b2, w3p, b3p)

    # Strip batch padding; output is already the single real value column.
    return out[:B]


def init_critic_params(key, state_dim, hidden=HIDDEN):
    """Deterministic init mimicking nn.Linear's U(-1/sqrt(fan_in), 1/sqrt(fan_in)).

    Weights are stored as [in_features, out_features] (transposed vs PyTorch).
    Biases are stored as [1, out_features] for in-kernel broadcasting.
    """
    k1, k2, k3, k4, k5, k6 = jax.random.split(key, 6)

    def uniform(k, shape, fan_in):
        bound = 1.0 / jnp.sqrt(jnp.float32(fan_in))
        return jax.random.uniform(
            k, shape, dtype=jnp.float32, minval=-bound, maxval=bound
        )

    w1 = uniform(k1, (state_dim, hidden), state_dim)
    b1 = uniform(k2, (1, hidden), state_dim)
    w2 = uniform(k3, (hidden, hidden), hidden)
    b2 = uniform(k4, (1, hidden), hidden)
    w3 = uniform(k5, (hidden, 1), hidden)
    b3 = uniform(k6, (1, 1), hidden)
    return (w1, b1, w2, b2, w3, b3)


def critic_ref(x, params):
    """Pure-JAX fp32 reference for correctness checking."""
    w1, b1, w2, b2, w3, b3 = params
    h1 = jnp.tanh(x @ w1 + b1)
    h2 = jnp.tanh(h1 @ w2 + b2)
    return h2 @ w3 + b3


if __name__ == "__main__":
    key = jax.random.PRNGKey(0)
    k_params, k_x = jax.random.split(key)

    batch = 8
    state_dim = 32

    params = init_critic_params(k_params, state_dim)
    prepared = prepare_critic_params(params)   # one-time param prep (hoisted)
    x = jax.random.normal(k_x, (batch, state_dim), dtype=jnp.float32)

    out = critic_forward(x, prepared)
    out = jax.block_until_ready(out)

    ref = critic_ref(x, params)
    assert out.shape == (batch, 1), out.shape
    # fp32 end-to-end (fp32 MXU accumulation) => tight tolerance.
    assert jnp.allclose(out, ref, atol=1e-4, rtol=1e-4), "mismatch vs reference"

    print("KERNEL_OK")
</pallas_src>

<mosaic_0001>
module attributes {stable_mosaic.version = 11 : i64} {
  func.func @critic_kernel(%arg0: i32, %arg1: memref<8x32xf32, #tpu.memory_space<vmem>>, %arg2: memref<32x64xf32, #tpu.memory_space<vmem>>, %arg3: memref<1x64xf32, #tpu.memory_space<vmem>>, %arg4: memref<64x64xf32, #tpu.memory_space<vmem>>, %arg5: memref<1x64xf32, #tpu.memory_space<vmem>>, %arg6: memref<64x128xf32, #tpu.memory_space<vmem>>, %arg7: memref<1x128xf32, #tpu.memory_space<vmem>>, %arg8: memref<8x1xf32, #tpu.memory_space<vmem>>) attributes {dimension_semantics = [#tpu.dimension_semantics<parallel>], iteration_bounds = array<i64: 1>, scalar_prefetch = 0 : i64, scratch_operands = 0 : i64, tpu.core_type = #tpu.core_type<tc>, window_params = [{transform_indices = @transform_0, window_bounds = array<i64: 8, 32>}, {pipeline_mode = #tpu.pipeline_mode<synchronous>, transform_indices = @transform_1, window_bounds = array<i64: 32, 64>}, {pipeline_mode = #tpu.pipeline_mode<synchronous>, transform_indices = @transform_2, window_bounds = array<i64: 1, 64>}, {pipeline_mode = #tpu.pipeline_mode<synchronous>, transform_indices = @transform_3, window_bounds = array<i64: 64, 64>}, {pipeline_mode = #tpu.pipeline_mode<synchronous>, transform_indices = @transform_4, window_bounds = array<i64: 1, 64>}, {pipeline_mode = #tpu.pipeline_mode<synchronous>, transform_indices = @transform_5, window_bounds = array<i64: 64, 128>}, {pipeline_mode = #tpu.pipeline_mode<synchronous>, transform_indices = @transform_6, window_bounds = array<i64: 1, 128>}, {transform_indices = @transform_7, window_bounds = array<i64: 8, 1>}]} {
    %c0 = arith.constant 0 : index
    %c0_0 = arith.constant 0 : index
    %0 = vector.load %arg1[%c0, %c0_0] : memref<8x32xf32, #tpu.memory_space<vmem>>, vector<8x32xf32>
    %c0_1 = arith.constant 0 : index
    %c0_2 = arith.constant 0 : index
    %1 = vector.load %arg2[%c0_1, %c0_2] : memref<32x64xf32, #tpu.memory_space<vmem>>, vector<32x64xf32>
    %cst = arith.constant dense<0.000000e+00> : vector<8x64xf32>
    %2 = tpu.matmul %0, %1, %cst {dimension_numbers = #tpu.dot_dimension_numbers<[1], [0], [0], [1], [0, 0, 1, 1], [], []>} : vector<8x32xf32>, vector<32x64xf32>, vector<8x64xf32> -> vector<8x64xf32>
    %c0_3 = arith.constant 0 : index
    %c0_4 = arith.constant 0 : index
    %3 = vector.load %arg3[%c0_3, %c0_4] : memref<1x64xf32, #tpu.memory_space<vmem>>, vector<1x64xf32>
    %4 = vector.broadcast %3 : vector<1x64xf32> to vector<8x64xf32>
    %5 = arith.addf %2, %4 : vector<8x64xf32>
    %6 = math.tanh %5 : vector<8x64xf32>
    %c0_5 = arith.constant 0 : index
    %c0_6 = arith.constant 0 : index
    %7 = vector.load %arg4[%c0_5, %c0_6] : memref<64x64xf32, #tpu.memory_space<vmem>>, vector<64x64xf32>
    %cst_7 = arith.constant dense<0.000000e+00> : vector<8x64xf32>
    %8 = tpu.matmul %6, %7, %cst_7 {dimension_numbers = #tpu.dot_dimension_numbers<[1], [0], [0], [1], [0, 0, 1, 1], [], []>} : vector<8x64xf32>, vector<64x64xf32>, vector<8x64xf32> -> vector<8x64xf32>
    %c0_8 = arith.constant 0 : index
    %c0_9 = arith.constant 0 : index
    %9 = vector.load %arg5[%c0_8, %c0_9] : memref<1x64xf32, #tpu.memory_space<vmem>>, vector<1x64xf32>
    %10 = vector.broadcast %9 : vector<1x64xf32> to vector<8x64xf32>
    %11 = arith.addf %8, %10 : vector<8x64xf32>
    %12 = math.tanh %11 : vector<8x64xf32>
    %c0_10 = arith.constant 0 : index
    %c0_11 = arith.constant 0 : index
    %13 = vector.load %arg6[%c0_10, %c0_11] : memref<64x128xf32, #tpu.memory_space<vmem>>, vector<64x128xf32>
    %cst_12 = arith.constant dense<0.000000e+00> : vector<8x128xf32>
    %14 = tpu.matmul %12, %13, %cst_12 {dimension_numbers = #tpu.dot_dimension_numbers<[1], [0], [0], [1], [0, 0, 1, 1], [], []>} : vector<8x64xf32>, vector<64x128xf32>, vector<8x128xf32> -> vector<8x128xf32>
    %c0_13 = arith.constant 0 : index
    %c0_14 = arith.constant 0 : index
    %15 = vector.load %arg7[%c0_13, %c0_14] : memref<1x128xf32, #tpu.memory_space<vmem>>, vector<1x128xf32>
    %16 = vector.broadcast %15 : vector<1x128xf32> to vector<8x128xf32>
    %17 = arith.addf %14, %16 : vector<8x128xf32>
    %18 = vector.extract_strided_slice %17 {offsets = [0, 0], sizes = [8, 1], strides = [1, 1]} : vector<8x128xf32> to vector<8x1xf32>
    %c0_15 = arith.constant 0 : index
    %c0_16 = arith.constant 0 : index
    %19 = vector.load %arg8[%c0_15, %c0_16] : memref<8x1xf32, #tpu.memory_space<vmem>>, vector<8x1xf32>
    tpu.vector_store %arg8[%c0_15, %c0_16], %18 {strides = array<i32>} : memref<8x1xf32, #tpu.memory_space<vmem>>, vector<8x1xf32>,
    return
  }
  func.func @transform_0(%arg0: i32) -> (i32, i32) {
    %c0_i32 = arith.constant 0 : i32
    %c0_i32_0 = arith.constant 0 : i32
    return %arg0, %c0_i32 : i32, i32
  }
  func.func @transform_1(%arg0: i32) -> (i32, i32) {
    %c0_i32 = arith.constant 0 : i32
    %c0_i32_0 = arith.constant 0 : i32
    %c0_i32_1 = arith.constant 0 : i32
    return %c0_i32, %c0_i32_0 : i32, i32
  }
  func.func @transform_2(%arg0: i32) -> (i32, i32) {
    %c0_i32 = arith.constant 0 : i32
    %c0_i32_0 = arith.constant 0 : i32
    %c0_i32_1 = arith.constant 0 : i32
    return %c0_i32, %c0_i32_0 : i32, i32
  }
  func.func @transform_3(%arg0: i32) -> (i32, i32) {
    %c0_i32 = arith.constant 0 : i32
    %c0_i32_0 = arith.constant 0 : i32
    %c0_i32_1 = arith.constant 0 : i32
    return %c0_i32, %c0_i32_0 : i32, i32
  }
  func.func @transform_4(%arg0: i32) -> (i32, i32) {
    %c0_i32 = arith.constant 0 : i32
    %c0_i32_0 = arith.constant 0 : i32
    %c0_i32_1 = arith.constant 0 : i32
    return %c0_i32, %c0_i32_0 : i32, i32
  }
  func.func @transform_5(%arg0: i32) -> (i32, i32) {
    %c0_i32 = arith.constant 0 : i32
    %c0_i32_0 = arith.constant 0 : i32
    %c0_i32_1 = arith.constant 0 : i32
    return %c0_i32, %c0_i32_0 : i32, i32
  }
  func.func @transform_6(%arg0: i32) -> (i32, i32) {
    %c0_i32 = arith.constant 0 : i32
    %c0_i32_0 = arith.constant 0 : i32
    %c0_i32_1 = arith.constant 0 : i32
    return %c0_i32, %c0_i32_0 : i32, i32
  }
  func.func @transform_7(%arg0: i32) -> (i32, i32) {
    %c0_i32 = arith.constant 0 : i32
    %c0_i32_0 = arith.constant 0 : i32
    return %arg0, %c0_i32 : i32, i32
  }
}

</mosaic_0001>

<llo_original>
// kernel: tpu_custom_call.1
$region0: #{tpu_custom_call.1}
  #allocation0 [shape = 'u32[]', space=smem, size = 0x4, offset = 0x4, fixed_abs, tag = 'smem constant byte address 0x4 - core index']
  #allocation1 [shape = 'u32[72,128]{1,0:T(1,128)}', space=vmem, size = 0x9000, scoped, tag = 'internal scratch']
  %s0 = inlined_call_operand.hbm [shape: f32[8,32], index: 0, kind: input, shape index: {}]
  %s1 = inlined_call_operand.hbm [shape: f32[32,64], index: 1, kind: input, shape index: {}]
  %s2 = inlined_call_operand.vmem [shape: f32[1,64], index: 2, kind: input, shape index: {}]
  %s3 = inlined_call_operand.hbm [shape: f32[64,64], index: 3, kind: input, shape index: {}]
  %s4 = inlined_call_operand.vmem [shape: f32[1,64], index: 4, kind: input, shape index: {}]
  %s5 = inlined_call_operand.hbm [shape: f32[64,128], index: 5, kind: input, shape index: {}]
  %s6 = inlined_call_operand.vmem [shape: f32[1,128], index: 6, kind: input, shape index: {}]
  %s7 = inlined_call_operand.vmem [shape: f32[8,1], index: 7, kind: output, shape index: {}]
  %s8 = sld [smem:[#allocation0]]
  $region54: #{tpu_custom_call.1} parent=0
    _
  %s10 = ssub.s32 1, %s8
  %s11 = scalar_select 0, %s10, %s8
  $region1: #{tpu_custom_call.1} parent=0
    #allocation2 [shape = 'u8[4096]{0}', space=vmem, size = 0x1000, scoped, tag = 'input window, operand 0, single buffered']
    #allocation3 [shape = 's32[1]{0}', space=sflag, size = 0x4, scoped, tag = 'scoped memory for tpu_custom_call.1']
    #allocation4 [shape = 'u8[16384]{0}', space=vmem, size = 0x4000, scoped, tag = 'input window, operand 1, single buffered']
    #allocation5 [shape = 's32[1]{0}', space=sflag, size = 0x4, scoped, tag = 'scoped memory for tpu_custom_call.1']
    #allocation6 [shape = 'u8[32768]{0}', space=vmem, size = 0x8000, scoped, tag = 'input window, operand 3, single buffered']
    #allocation7 [shape = 'u8[32768]{0}', space=vmem, size = 0x8000, scoped, tag = 'input window, operand 5, single buffered']
    #allocation8 [shape = 's32[1]{0}', space=sflag, size = 0x4, scoped, tag = 'scoped memory for tpu_custom_call.1']
    %12 = vsyncpa [#allocation3], 0
    %13 = vsyncpa [#allocation5], 0
    %14 = vsyncpa [#allocation8], 0
    // Predicated region
    $region2: #{tpu_custom_call.1} parent=1 // pred_check
      _
    $region3: #{tpu_custom_call.1} parent=1 // pred_check_branch
      %16 = sbr.rel (0) target = $region5
    $region4: #{tpu_custom_call.1} parent=1 // pred_region
      %18 = vsyncadd [#allocation3], 0
      %s20 = sshll.u32 %s0, 4
      %s21 = int_to_ptr.hbm [resolvable:$true] %s20
      %s22 = sshll.u32 [#allocation2], 4
      %s23 = int_to_ptr.vmem [resolvable:$true] %s22
      %25 = dma.hbm_to_vmem [thread:$0]  %s21, 128, %s23, [#allocation3]
    $region5: #{tpu_custom_call.1} parent=1 // pred_fallthru
      _
    // Predicated region
    $region6: #{tpu_custom_call.1} parent=1 // pred_check
      _
    $region7: #{tpu_custom_call.1} parent=1 // pred_check_branch
      %27 = sbr.rel (0) target = $region9
    $region8: #{tpu_custom_call.1} parent=1 // pred_region
      %29 = vsyncadd [#allocation5], 0
      %s30 = sshll.u32 %s1, 4
      %s31 = int_to_ptr.hbm [resolvable:$true] %s30
      %s32 = sshll.u32 [#allocation4], 4
      %s33 = int_to_ptr.vmem [resolvable:$true] %s32
      %38 = dma.hbm_to_vmem [thread:$0]  %s31, 512, %s33, [#allocation5], 128, 128, 8
    $region9: #{tpu_custom_call.1} parent=1 // pred_fallthru
      _
    // Predicated region
    $region10: #{tpu_custom_call.1} parent=1 // pred_check
      _
    $region11: #{tpu_custom_call.1} parent=1 // pred_check_branch
      %40 = sbr.rel (0) target = $region13
    $region12: #{tpu_custom_call.1} parent=1 // pred_region
      _
    $region13: #{tpu_custom_call.1} parent=1 // pred_fallthru
      _
    // Predicated region
    $region14: #{tpu_custom_call.1} parent=1 // pred_check
      _
    $region15: #{tpu_custom_call.1} parent=1 // pred_check_branch
      %42 = sbr.rel (0) target = $region17
    $region16: #{tpu_custom_call.1} parent=1 // pred_region
      %44 = vsyncadd [#allocation5], 0
      %s45 = sshll.u32 %s3, 4
      %s46 = int_to_ptr.hbm [resolvable:$true] %s45
      %s47 = sshll.u32 [#allocation6], 4
      %s48 = int_to_ptr.vmem [resolvable:$true] %s47
      %53 = dma.hbm_to_vmem [thread:$0]  %s46, 1024, %s48, [#allocation5], 128, 128, 8
    $region17: #{tpu_custom_call.1} parent=1 // pred_fallthru
      _
    // Predicated region
    $region18: #{tpu_custom_call.1} parent=1 // pred_check
      _
    $region19: #{tpu_custom_call.1} parent=1 // pred_check_branch
      %55 = sbr.rel (0) target = $region21
    $region20: #{tpu_custom_call.1} parent=1 // pred_region
      _
    $region21: #{tpu_custom_call.1} parent=1 // pred_fallthru
      _
    // Predicated region
    $region22: #{tpu_custom_call.1} parent=1 // pred_check
      _
    $region23: #{tpu_custom_call.1} parent=1 // pred_check_branch
      %57 = sbr.rel (0) target = $region25
    $region24: #{tpu_custom_call.1} parent=1 // pred_region
      %59 = vsyncadd [#allocation8], 0
      %s60 = sshll.u32 %s5, 4
      %s61 = int_to_ptr.hbm [resolvable:$true] %s60
      %s62 = sshll.u32 [#allocation7], 4
      %s63 = int_to_ptr.vmem [resolvable:$true] %s62
      %68 = dma.hbm_to_vmem [thread:$0]  %s61, 1024, %s63, [#allocation8], 128, 128, 8
    $region25: #{tpu_custom_call.1} parent=1 // pred_fallthru
      _
    // Predicated region
    $region26: #{tpu_custom_call.1} parent=1 // pred_check
      _
    $region27: #{tpu_custom_call.1} parent=1 // pred_check_branch
      %70 = sbr.rel (0) target = $region29
    $region28: #{tpu_custom_call.1} parent=1 // pred_region
      _
    $region29: #{tpu_custom_call.1} parent=1 // pred_fallthru
      _
    // Predicated region
    $region30: #{tpu_custom_call.1} parent=1 // pred_check
      _
    $region31: #{tpu_custom_call.1} parent=1 // pred_check_branch
      %72 = sbr.rel (0) target = $region33
    $region32: #{tpu_custom_call.1} parent=1 // pred_region
      %74 = dma.done [#allocation3], 128
    $region33: #{tpu_custom_call.1} parent=1 // pred_fallthru
      _
    // Predicated region
    $region34: #{tpu_custom_call.1} parent=1 // pred_check
      _
    $region35: #{tpu_custom_call.1} parent=1 // pred_check_branch
      %76 = sbr.rel (0) target = $region37
    $region36: #{tpu_custom_call.1} parent=1 // pred_region
      %78 = dma.done [#allocation5], 512
    $region37: #{tpu_custom_call.1} parent=1 // pred_fallthru
      _
    // Predicated region
    $region38: #{tpu_custom_call.1} parent=1 // pred_check
      _
    $region39: #{tpu_custom_call.1} parent=1 // pred_check_branch
      %80 = sbr.rel (0) target = $region41
    $region40: #{tpu_custom_call.1} parent=1 // pred_region
      %82 = dma.done [#allocation5], 1024
    $region41: #{tpu_custom_call.1} parent=1 // pred_fallthru
      _
    // Predicated region
    $region42: #{tpu_custom_call.1} parent=1 // pred_check
      _
    $region43: #{tpu_custom_call.1} parent=1 // pred_check_branch
      %84 = sbr.rel (0) target = $region45
    $region44: #{tpu_custom_call.1} parent=1 // pred_region
      %86 = dma.done [#allocation8], 1024
    $region45: #{tpu_custom_call.1} parent=1 // pred_fallthru
      _
    %v87 = vld [vmem:[#allocation2] sm:$0xff]
    %v88 = vld [vmem:[#allocation4] sm:$0xff]
    %v89 = vld [vmem:[#allocation4 + $0x8] sm:$0xff]
    %v90 = vld [vmem:[#allocation4 + $0x10] sm:$0xff]
    %v91 = vld [vmem:[#allocation4 + $0x18] sm:$0xff]
    %v92 = vld [vmem:[%s2] sm:$0x1]
    %v94 = vperm.slane %v92, 0
    %vm96 = vcmask 261120
    %v98 = vsel %vm96, %v87, 0
    %100 = vmatpush.msra.mxu0 0.0
    %101 = vmatpush.msra.mxu0 0.0
    %102 = vmatpush.msra.mxu0 0.0
    %103 = vmatpush.msra.mxu0 0.0
    %104 = vmatpush.msra.mxu0 0.0
    %105 = vmatpush.msra.mxu0 0.0
    %106 = vmatpush.msra.mxu0 0.0
    %107 = vmatpush.msra.mxu0 0.0
    %108 = vmatpush.msra.mxu0 0.0
    %109 = vmatpush.msra.mxu0 0.0
    %110 = vmatpush.msra.mxu0 0.0
    %111 = vmatpush.msra.mxu0 0.0
    %112 = vmatpush.msra.mxu0 %v91
    %113 = vmatpush.msra.mxu0 %v90
    %114 = vmatpush.msra.mxu0 %v89
    %115 = vmatpush.msra.mxu0 %v88
    %116 = vmatmul.f32.gmra.mxu0 %v98
    %v117 = vpop.f32.mrf.mxu0
    %v118 = vadd.f32 %v94, %v117
    %119 = vdwg.mxu0
    %v120 = vtanh.pop %v118
    %v121 = vld [vmem:[#allocation6] sm:$0xff]
    %v122 = vld [vmem:[#allocation6 + $0x8] sm:$0xff]
    %v123 = vld [vmem:[#allocation6 + $0x10] sm:$0xff]
    %v124 = vld [vmem:[#allocation6 + $0x18] sm:$0xff]
    %v125 = vld [vmem:[#allocation6 + $0x20] sm:$0xff]
    %v126 = vld [vmem:[#allocation6 + $0x28] sm:$0xff]
    %v127 = vld [vmem:[#allocation6 + $0x30] sm:$0xff]
    %v128 = vld [vmem:[#allocation6 + $0x38] sm:$0xff]
    %v129 = vld [vmem:[%s4] sm:$0x1]
    %v131 = vperm.slane %v129, 0
    %vm133 = vcmask 523264
    %v135 = vsel %vm133, %v120, 0
    %137 = vmatpush.msra.mxu0 0.0
    %138 = vmatpush.msra.mxu0 0.0
    %139 = vmatpush.msra.mxu0 0.0
    %140 = vmatpush.msra.mxu0 0.0
    %141 = vmatpush.msra.mxu0 0.0
    %142 = vmatpush.msra.mxu0 0.0
    %143 = vmatpush.msra.mxu0 0.0
    %144 = vmatpush.msra.mxu0 0.0
    %145 = vmatpush.msra.mxu0 %v128
    %146 = vmatpush.msra.mxu0 %v127
    %147 = vmatpush.msra.mxu0 %v126
    %148 = vmatpush.msra.mxu0 %v125
    %149 = vmatpush.msra.mxu0 %v124
    %150 = vmatpush.msra.mxu0 %v123
    %151 = vmatpush.msra.mxu0 %v122
    %152 = vmatpush.msra.mxu0 %v121
    %153 = vmatmul.f32.gmra.mxu0 %v135
    %v154 = vpop.f32.mrf.mxu0
    %v155 = vadd.f32 %v131, %v154
    %156 = vdwg.mxu0
    %v157 = vtanh.pop %v155
    %v158 = vld [vmem:[#allocation7] sm:$0xff]
    %v159 = vld [vmem:[#allocation7 + $0x8] sm:$0xff]
    %v160 = vld [vmem:[#allocation7 + $0x10] sm:$0xff]
    %v161 = vld [vmem:[#allocation7 + $0x18] sm:$0xff]
    %v162 = vld [vmem:[#allocation7 + $0x20] sm:$0xff]
    %v163 = vld [vmem:[#allocation7 + $0x28] sm:$0xff]
    %v164 = vld [vmem:[#allocation7 + $0x30] sm:$0xff]
    %v165 = vld [vmem:[#allocation7 + $0x38] sm:$0xff]
    %v166 = vld [vmem:[%s6] sm:$0x1]
    %v168 = vperm.slane %v166, 0
    %v171 = vsel %vm133, %v157, 0
    %173 = vmatpush.msra.mxu0 0.0
    %174 = vmatpush.msra.mxu0 0.0
    %175 = vmatpush.msra.mxu0 0.0
    %176 = vmatpush.msra.mxu0 0.0
    %177 = vmatpush.msra.mxu0 0.0
    %178 = vmatpush.msra.mxu0 0.0
    %179 = vmatpush.msra.mxu0 0.0
    %180 = vmatpush.msra.mxu0 0.0
    %181 = vmatpush.msra.mxu0 %v165
    %182 = vmatpush.msra.mxu0 %v164
    %183 = vmatpush.msra.mxu0 %v163
    %184 = vmatpush.msra.mxu0 %v162
    %185 = vmatpush.msra.mxu0 %v161
    %186 = vmatpush.msra.mxu0 %v160
    %187 = vmatpush.msra.mxu0 %v159
    %188 = vmatpush.msra.mxu0 %v158
    %189 = vmatmul.f32.gmra.mxu0 %v171
    %v190 = vpop.f32.mrf.mxu0
    %v191 = vadd.f32 %v168, %v190
    %192 = vdwg.mxu0
    %vm193 = vcmask 7168
    %194 = vst.msk [vmem:[%s7] sm:$0xff] %vm193, %v191
    // Predicated region
    $region46: #{tpu_custom_call.1} parent=1 // pred_check
      _
    $region47: #{tpu_custom_call.1} parent=1 // pred_check_branch
      %196 = sbr.rel (0) target = $region49
    $region48: #{tpu_custom_call.1} parent=1 // pred_region
      _
    $region49: #{tpu_custom_call.1} parent=1 // pred_fallthru
      _
    // Predicated region
    $region50: #{tpu_custom_call.1} parent=1 // pred_check
      _
    $region51: #{tpu_custom_call.1} parent=1 // pred_check_branch
      %198 = sbr.rel (0) target = $region53
    $region52: #{tpu_custom_call.1} parent=1 // pred_region
      _
    $region53: #{tpu_custom_call.1} parent=1 // pred_fallthru
      _
    %199 = vsyncpa [#allocation3], 1
    %200 = vsyncpa [#allocation5], 1
    %201 = vsyncpa [#allocation8], 1

</llo_original>
